<compile_context>
chip_gen: v7x
topology: tpu7x:2x2x1
jax: 0.10.0
libtpu: 0.0.40
codegen_flags: <defaults>
</compile_context>

<pallas_src>
import jax
import jax.numpy as jnp
from jax import lax
from jax.experimental import pallas as pl
from jax.experimental.pallas import tpu as pltpu


LANE = 128  # vreg lane width / MXU-friendly padding target for feature dims


# ----------------------------------------------------------------------------
# Pallas kernel: fused conv(im2col matmul) + bias + ReLU + avg-pool(MXU) + FC
# ----------------------------------------------------------------------------
def _model_kernel(patches_ref, wconv_ref, bconv_ref, pool_ref, wfc_ref,
                  bfc_ref, out_ref):
    # patches: (B*HW, 128)  im2col patches, K padded 36 -> 128 with zeros
    # wconv:   (128, 128)   (Cin*K*K, Cout) zero-padded
    # bconv:   (1, 128)     conv bias, zero-padded
    # pool:    (B, B*HW)    block-diagonal 1/HW pooling matrix
    # wfc:     (128, 128)   (Cout, Dout) zero-padded
    # bfc:     (1, 128)     FC bias, zero-padded
    # out:     (B, 128)     logits, real values live in [:, :Dout]

    # Conv2d as a single lane-dense MXU matmul: M = B*HW, K = N = 128.
    conv = jnp.dot(patches_ref[...], wconv_ref[...],
                   preferred_element_type=jnp.float32)          # (B*HW, 128)
    conv = jnp.maximum(conv + bconv_ref[...], 0.0)              # bias + ReLU

    # Global average pool as an MXU matmul (1/HW folded into the pool matrix).
    pooled = jnp.dot(pool_ref[...], conv,
                     preferred_element_type=jnp.float32)        # (B, 128)

    # Final linear head, also lane-dense.
    logits = jnp.dot(pooled, wfc_ref[...],
                     preferred_element_type=jnp.float32)        # (B, 128)
    out_ref[...] = logits + bfc_ref[...]


def _vmem_spec():
    return pl.BlockSpec(memory_space=pltpu.MemorySpace.VMEM)


def model_wrapper_forward(x, wconv, bconv, wfc, bfc):
    """x: (B, Cin, H, W) float32 NCHW.  Returns (B, Dout) float32."""
    B, Cin, H, W = x.shape
    K = 3
    Cout = wconv.shape[0]
    Dout = wfc.shape[0]
    HW = H * W
    CKK = Cin * K * K

    KP = LANE   # padded contraction dim (Cin*K*K -> 128)
    CP = LANE   # padded conv output channels (Cout -> 128)
    DP = LANE   # padded head output (Dout -> 128)

    # --- glue: im2col (padding=1, stride=1), feature axis = (cin, i*K + j) ---
    xp = jnp.pad(x, ((0, 0), (0, 0), (1, 1), (1, 1)))
    patches = jnp.stack(
        [xp[:, :, i:i + H, j:j + W] for i in range(K) for j in range(K)],
        axis=-1)                                            # (B, Cin, H, W, K*K)
    patches = patches.transpose(0, 2, 3, 1, 4).reshape(B * HW, CKK)
    patches = jnp.pad(patches, ((0, 0), (0, KP - CKK)))     # (B*HW, 128)

    # --- weights, flattened consistently and zero-padded to lane width -------
    wconv_mat = jnp.pad(wconv.reshape(Cout, CKK).T,
                        ((0, KP - CKK), (0, CP - Cout)))    # (128, 128)
    bconv_row = jnp.pad(bconv.reshape(1, Cout),
                        ((0, 0), (0, CP - Cout)))           # (1, 128)
    wfc_mat = jnp.pad(wfc.T, ((0, CP - Cout), (0, DP - Dout)))   # (128, 128)
    bfc_row = jnp.pad(bfc.reshape(1, Dout),
                      ((0, 0), (0, DP - Dout)))             # (1, 128)

    # Block-diagonal pooling matrix: pool[b, b*HW:(b+1)*HW] = 1/HW.
    pool_mat = jnp.repeat(jnp.eye(B, dtype=jnp.float32), HW, axis=1) / float(HW)

    # Advisory cost estimate so XLA schedules the custom call sensibly.
    flops = 2 * (B * HW) * KP * CP + 2 * B * (B * HW) * CP + 2 * B * CP * DP
    bytes_accessed = 4 * ((B * HW) * KP + KP * CP + CP + B * (B * HW)
                          + CP * DP + DP + B * DP)
    cost = pl.CostEstimate(flops=flops, transcendentals=0,
                           bytes_accessed=bytes_accessed)

    out_padded = pl.pallas_call(
        _model_kernel,
        out_shape=jax.ShapeDtypeStruct((B, DP), jnp.float32),
        in_specs=[_vmem_spec()] * 6,
        out_specs=_vmem_spec(),
        cost_estimate=cost,
    )(patches, wconv_mat, bconv_row, pool_mat, wfc_mat, bfc_row)

    return out_padded[:, :Dout]


# ----------------------------------------------------------------------------
# Pure-JAX reference (for a correctness check against the Pallas kernel)
# ----------------------------------------------------------------------------
def reference_forward(x, wconv, bconv, wfc, bfc):
    conv = lax.conv_general_dilated(
        x, wconv, window_strides=(1, 1), padding="SAME",
        dimension_numbers=("NCHW", "OIHW", "NCHW"))
    conv = jnp.maximum(conv + bconv[None, :, None, None], 0.0)
    pooled = jnp.mean(conv, axis=(2, 3))                    # (B, Cout)
    return pooled @ wfc.T + bfc[None, :]


if __name__ == "__main__":
    key = jax.random.PRNGKey(0)
    kx, kw1, kb1, kw2, kb2 = jax.random.split(key, 5)

    B, Cin, H, W = 2, 4, 16, 16
    Cout, K, Dout = 8, 3, 16

    x = jax.random.normal(kx, (B, Cin, H, W), dtype=jnp.float32)
    wconv = jax.random.normal(kw1, (Cout, Cin, K, K), dtype=jnp.float32) * 0.1
    bconv = jax.random.normal(kb1, (Cout,), dtype=jnp.float32) * 0.1
    wfc = jax.random.normal(kw2, (Dout, Cout), dtype=jnp.float32) * 0.1
    bfc = jax.random.normal(kb2, (Dout,), dtype=jnp.float32) * 0.1

    out = model_wrapper_forward(x, wconv, bconv, wfc, bfc)
    out = jax.block_until_ready(out)

    ref = jax.block_until_ready(reference_forward(x, wconv, bconv, wfc, bfc))
    assert out.shape == (B, Dout)
    assert jnp.allclose(out, ref, atol=1e-4, rtol=1e-4), "mismatch vs reference"

    print("KERNEL_OK")
</pallas_src>

<mosaic_0001>
module attributes {stable_mosaic.version = 11 : i64} {
  func.func @_model_kernel(%arg0: memref<512x128xf32, #tpu.memory_space<vmem>>, %arg1: memref<128x128xf32, #tpu.memory_space<vmem>>, %arg2: memref<1x128xf32, #tpu.memory_space<vmem>>, %arg3: memref<2x512xf32, #tpu.memory_space<vmem>>, %arg4: memref<128x128xf32, #tpu.memory_space<vmem>>, %arg5: memref<1x128xf32, #tpu.memory_space<vmem>>, %arg6: memref<2x128xf32, #tpu.memory_space<vmem>>) attributes {dimension_semantics = [], scalar_prefetch = 0 : i64, scratch_operands = 0 : i64, tpu.core_type = #tpu.core_type<tc>} {
    %c0 = arith.constant 0 : index
    %c0_0 = arith.constant 0 : index
    %0 = vector.load %arg0[%c0, %c0_0] : memref<512x128xf32, #tpu.memory_space<vmem>>, vector<512x128xf32>
    %c0_1 = arith.constant 0 : index
    %c0_2 = arith.constant 0 : index
    %1 = vector.load %arg1[%c0_1, %c0_2] : memref<128x128xf32, #tpu.memory_space<vmem>>, vector<128x128xf32>
    %cst = arith.constant dense<0.000000e+00> : vector<512x128xf32>
    %2 = tpu.matmul %0, %1, %cst {dimension_numbers = #tpu.dot_dimension_numbers<[1], [0], [0], [1], [0, 0, 1, 1], [], []>} : vector<512x128xf32>, vector<128x128xf32>, vector<512x128xf32> -> vector<512x128xf32>
    %c0_3 = arith.constant 0 : index
    %c0_4 = arith.constant 0 : index
    %3 = vector.load %arg2[%c0_3, %c0_4] : memref<1x128xf32, #tpu.memory_space<vmem>>, vector<1x128xf32>
    %4 = vector.broadcast %3 : vector<1x128xf32> to vector<512x128xf32>
    %5 = arith.addf %2, %4 : vector<512x128xf32>
    %cst_5 = arith.constant 0.000000e+00 : f32
    %6 = vector.broadcast %cst_5 : f32 to vector<512x128xf32>
    %7 = arith.maximumf %5, %6 : vector<512x128xf32>
    %c0_6 = arith.constant 0 : index
    %c0_7 = arith.constant 0 : index
    %8 = vector.load %arg3[%c0_6, %c0_7] : memref<2x512xf32, #tpu.memory_space<vmem>>, vector<2x512xf32>
    %cst_8 = arith.constant dense<0.000000e+00> : vector<2x128xf32>
    %9 = tpu.matmul %8, %7, %cst_8 {dimension_numbers = #tpu.dot_dimension_numbers<[1], [0], [0], [1], [0, 0, 1, 1], [], []>} : vector<2x512xf32>, vector<512x128xf32>, vector<2x128xf32> -> vector<2x128xf32>
    %c0_9 = arith.constant 0 : index
    %c0_10 = arith.constant 0 : index
    %10 = vector.load %arg4[%c0_9, %c0_10] : memref<128x128xf32, #tpu.memory_space<vmem>>, vector<128x128xf32>
    %cst_11 = arith.constant dense<0.000000e+00> : vector<2x128xf32>
    %11 = tpu.matmul %9, %10, %cst_11 {dimension_numbers = #tpu.dot_dimension_numbers<[1], [0], [0], [1], [0, 0, 1, 1], [], []>} : vector<2x128xf32>, vector<128x128xf32>, vector<2x128xf32> -> vector<2x128xf32>
    %c0_12 = arith.constant 0 : index
    %c0_13 = arith.constant 0 : index
    %12 = vector.load %arg5[%c0_12, %c0_13] : memref<1x128xf32, #tpu.memory_space<vmem>>, vector<1x128xf32>
    %13 = vector.broadcast %12 : vector<1x128xf32> to vector<2x128xf32>
    %14 = arith.addf %11, %13 : vector<2x128xf32>
    %c0_14 = arith.constant 0 : index
    %c0_15 = arith.constant 0 : index
    %15 = vector.load %arg6[%c0_14, %c0_15] : memref<2x128xf32, #tpu.memory_space<vmem>>, vector<2x128xf32>
    tpu.vector_store %arg6[%c0_14, %c0_15], %14 {strides = array<i32>} : memref<2x128xf32, #tpu.memory_space<vmem>>, vector<2x128xf32>,
    return
  }
}

</mosaic_0001>

<llo_original>
// kernel: tpu_custom_call.1
$region0: #{tpu_custom_call.1}
  #allocation0 [shape = 'u32[]', space=smem, size = 0x4, offset = 0x4, fixed_abs, tag = 'smem constant byte address 0x4 - core index']
  #allocation1 [shape = 'u32[144,128]{1,0:T(1,128)}', space=vmem, size = 0x12000, scoped, tag = 'internal scratch']
  %s0 = inlined_call_operand.hbm [shape: f32[512,128], index: 0, kind: input, shape index: {}]
  %s1 = inlined_call_operand.hbm [shape: f32[128,128], index: 1, kind: input, shape index: {}]
  %s2 = inlined_call_operand.vmem [shape: f32[1,128], index: 2, kind: input, shape index: {}]
  %s3 = inlined_call_operand.vmem [shape: f32[2,512], index: 3, kind: input, shape index: {}]
  %s4 = inlined_call_operand.hbm [shape: f32[128,128], index: 4, kind: input, shape index: {}]
  %s5 = inlined_call_operand.vmem [shape: f32[1,128], index: 5, kind: input, shape index: {}]
  %s6 = inlined_call_operand.hbm [shape: f32[2,128], index: 6, kind: output, shape index: {}]
  %s7 = sld [smem:[#allocation0]]
  $region46: #{tpu_custom_call.1} parent=0
    _
  %s9 = ssub.s32 1, %s7
  %s10 = scalar_select 0, %s9, %s7
  $region1: #{tpu_custom_call.1} parent=0
    #allocation2 [shape = 'u8[262144]{0}', space=vmem, size = 0x40000, scoped, tag = 'input window, operand 0, single buffered']
    #allocation3 [shape = 's32[1]{0}', space=sflag, size = 0x4, scoped, tag = 'scoped memory for tpu_custom_call.1']
    #allocation4 [shape = 's32[1]{0}', space=sflag, size = 0x4, scoped, tag = 'scoped memory for tpu_custom_call.1']
    #allocation5 [shape = 'u8[65536]{0}', space=vmem, size = 0x10000, scoped, tag = 'input window, operand 1, single buffered']
    #allocation6 [shape = 's32[1]{0}', space=sflag, size = 0x4, scoped, tag = 'scoped memory for tpu_custom_call.1']
    #allocation7 [shape = 'u8[65536]{0}', space=vmem, size = 0x10000, scoped, tag = 'input window, operand 4, single buffered']
    #allocation8 [shape = 'u8[1024]{0}', space=vmem, size = 0x400, scoped, tag = 'output window, operand 0, single buffered']
    %11 = vsyncpa [#allocation3], 0
    %12 = vsyncpa [#allocation6], 0
    %13 = vsyncpa [#allocation4], 0
    // Predicated region
    $region2: #{tpu_custom_call.1} parent=1 // pred_check
      _
    $region3: #{tpu_custom_call.1} parent=1 // pred_check_branch
      %15 = sbr.rel (0) target = $region5
    $region4: #{tpu_custom_call.1} parent=1 // pred_region
      %s17 = ssub.s32 8192, 8192
      %18 = vsyncadd [#allocation3], %s17
      %s19 = sshll.u32 [#allocation2], 4
      %s20 = int_to_ptr.vmem [resolvable:$true] %s19
      %25 = dma.hbm_to_vmem [thread:$0]  %s0, 8192, %s20, [#allocation3], 128, 128, 8
    $region5: #{tpu_custom_call.1} parent=1 // pred_fallthru
      _
    // Predicated region
    $region6: #{tpu_custom_call.1} parent=1 // pred_check
      _
    $region7: #{tpu_custom_call.1} parent=1 // pred_check_branch
      %27 = sbr.rel (0) target = $region9
    $region8: #{tpu_custom_call.1} parent=1 // pred_region
      %s29 = ssub.s32 2048, 2048
      %30 = vsyncadd [#allocation6], %s29
      %s31 = sshll.u32 [#allocation5], 4
      %s32 = int_to_ptr.vmem [resolvable:$true] %s31
      %37 = dma.hbm_to_vmem [thread:$0]  %s1, 2048, %s32, [#allocation6], 128, 128, 8
    $region9: #{tpu_custom_call.1} parent=1 // pred_fallthru
      _
    // Predicated region
    $region10: #{tpu_custom_call.1} parent=1 // pred_check
      _
    $region11: #{tpu_custom_call.1} parent=1 // pred_check_branch
      %39 = sbr.rel (0) target = $region13
    $region12: #{tpu_custom_call.1} parent=1 // pred_region
      _
    $region13: #{tpu_custom_call.1} parent=1 // pred_fallthru
      _
    // Predicated region
    $region14: #{tpu_custom_call.1} parent=1 // pred_check
      _
    $region15: #{tpu_custom_call.1} parent=1 // pred_check_branch
      %41 = sbr.rel (0) target = $region17
    $region16: #{tpu_custom_call.1} parent=1 // pred_region
      _
    $region17: #{tpu_custom_call.1} parent=1 // pred_fallthru
      _
    // Predicated region
    $region18: #{tpu_custom_call.1} parent=1 // pred_check
      _
    $region19: #{tpu_custom_call.1} parent=1 // pred_check_branch
      %43 = sbr.rel (0) target = $region21
    $region20: #{tpu_custom_call.1} parent=1 // pred_region
      %s45 = ssub.s32 2048, 2048
      %46 = vsyncadd [#allocation6], %s45
      %s47 = sshll.u32 [#allocation7], 4
      %s48 = int_to_ptr.vmem [resolvable:$true] %s47
      %53 = dma.hbm_to_vmem [thread:$0]  %s4, 2048, %s48, [#allocation6], 128, 128, 8
    $region21: #{tpu_custom_call.1} parent=1 // pred_fallthru
      _
    // Predicated region
    $region22: #{tpu_custom_call.1} parent=1 // pred_check
      _
    $region23: #{tpu_custom_call.1} parent=1 // pred_check_branch
      %55 = sbr.rel (0) target = $region25
    $region24: #{tpu_custom_call.1} parent=1 // pred_region
      _
    $region25: #{tpu_custom_call.1} parent=1 // pred_fallthru
      _
    // Predicated region
    $region26: #{tpu_custom_call.1} parent=1 // pred_check
      _
    $region27: #{tpu_custom_call.1} parent=1 // pred_check_branch
      %57 = sbr.rel (0) target = $region29
    $region28: #{tpu_custom_call.1} parent=1 // pred_region
      %58 = dma.done [#allocation3], 8192
    $region29: #{tpu_custom_call.1} parent=1 // pred_fallthru
      _
    // Predicated region
    $region30: #{tpu_custom_call.1} parent=1 // pred_check
      _
    $region31: #{tpu_custom_call.1} parent=1 // pred_check_branch
      %60 = sbr.rel (0) target = $region33
    $region32: #{tpu_custom_call.1} parent=1 // pred_region
      %61 = dma.done [#allocation6], 2048
    $region33: #{tpu_custom_call.1} parent=1 // pred_fallthru
      _
    // Predicated region
    $region34: #{tpu_custom_call.1} parent=1 // pred_check
      _
    $region35: #{tpu_custom_call.1} parent=1 // pred_check_branch
      %63 = sbr.rel (0) target = $region37
    $region36: #{tpu_custom_call.1} parent=1 // pred_region
      %64 = dma.done [#allocation6], 2048
    $region37: #{tpu_custom_call.1} parent=1 // pred_fallthru
      _
    %v65 = vld [vmem:[#allocation2] sm:$0xff]
    %v66 = vld [vmem:[#allocation2 + $0x8] sm:$0xff]
    %v67 = vld [vmem:[#allocation2 + $0x10] sm:$0xff]
    %v68 = vld [vmem:[#allocation2 + $0x18] sm:$0xff]
    %v69 = vld [vmem:[#allocation2 + $0x20] sm:$0xff]
    %v70 = vld [vmem:[#allocation2 + $0x28] sm:$0xff]
    %v71 = vld [vmem:[#allocation2 + $0x30] sm:$0xff]
    %v72 = vld [vmem:[#allocation2 + $0x38] sm:$0xff]
    %v73 = vld [vmem:[#allocation2 + $0x40] sm:$0xff]
    %v74 = vld [vmem:[#allocation2 + $0x48] sm:$0xff]
    %v75 = vld [vmem:[#allocation2 + $0x50] sm:$0xff]
    %v76 = vld [vmem:[#allocation2 + $0x58] sm:$0xff]
    %v77 = vld [vmem:[#allocation2 + $0x60] sm:$0xff]
    %v78 = vld [vmem:[#allocation2 + $0x68] sm:$0xff]
    %v79 = vld [vmem:[#allocation2 + $0x70] sm:$0xff]
    %v80 = vld [vmem:[#allocation2 + $0x78] sm:$0xff]
    %v81 = vld [vmem:[#allocation2 + $0x80] sm:$0xff]
    %v82 = vld [vmem:[#allocation2 + $0x88] sm:$0xff]
    %v83 = vld [vmem:[#allocation2 + $0x90] sm:$0xff]
    %v84 = vld [vmem:[#allocation2 + $0x98] sm:$0xff]
    %v85 = vld [vmem:[#allocation2 + $0xa0] sm:$0xff]
    %v86 = vld [vmem:[#allocation2 + $0xa8] sm:$0xff]
    %v87 = vld [vmem:[#allocation2 + $0xb0] sm:$0xff]
    %v88 = vld [vmem:[#allocation2 + $0xb8] sm:$0xff]
    %v89 = vld [vmem:[#allocation2 + $0xc0] sm:$0xff]
    %v90 = vld [vmem:[#allocation2 + $0xc8] sm:$0xff]
    %v91 = vld [vmem:[#allocation2 + $0xd0] sm:$0xff]
    %v92 = vld [vmem:[#allocation2 + $0xd8] sm:$0xff]
    %v93 = vld [vmem:[#allocation2 + $0xe0] sm:$0xff]
    %v94 = vld [vmem:[#allocation2 + $0xe8] sm:$0xff]
    %v95 = vld [vmem:[#allocation2 + $0xf0] sm:$0xff]
    %v96 = vld [vmem:[#allocation2 + $0xf8] sm:$0xff]
    %v97 = vld [vmem:[#allocation2 + $0x100] sm:$0xff]
    %v98 = vld [vmem:[#allocation2 + $0x108] sm:$0xff]
    %v99 = vld [vmem:[#allocation2 + $0x110] sm:$0xff]
    %v100 = vld [vmem:[#allocation2 + $0x118] sm:$0xff]
    %v101 = vld [vmem:[#allocation2 + $0x120] sm:$0xff]
    %v102 = vld [vmem:[#allocation2 + $0x128] sm:$0xff]
    %v103 = vld [vmem:[#allocation2 + $0x130] sm:$0xff]
    %v104 = vld [vmem:[#allocation2 + $0x138] sm:$0xff]
    %v105 = vld [vmem:[#allocation2 + $0x140] sm:$0xff]
    %v106 = vld [vmem:[#allocation2 + $0x148] sm:$0xff]
    %v107 = vld [vmem:[#allocation2 + $0x150] sm:$0xff]
    %v108 = vld [vmem:[#allocation2 + $0x158] sm:$0xff]
    %v109 = vld [vmem:[#allocation2 + $0x160] sm:$0xff]
    %v110 = vld [vmem:[#allocation2 + $0x168] sm:$0xff]
    %v111 = vld [vmem:[#allocation2 + $0x170] sm:$0xff]
    %v112 = vld [vmem:[#allocation2 + $0x178] sm:$0xff]
    %v113 = vld [vmem:[#allocation2 + $0x180] sm:$0xff]
    %v114 = vld [vmem:[#allocation2 + $0x188] sm:$0xff]
    %v115 = vld [vmem:[#allocation2 + $0x190] sm:$0xff]
    %v116 = vld [vmem:[#allocation2 + $0x198] sm:$0xff]
    %v117 = vld [vmem:[#allocation2 + $0x1a0] sm:$0xff]
    %v118 = vld [vmem:[#allocation2 + $0x1a8] sm:$0xff]
    %v119 = vld [vmem:[#allocation2 + $0x1b0] sm:$0xff]
    %v120 = vld [vmem:[#allocation2 + $0x1b8] sm:$0xff]
    %v121 = vld [vmem:[#allocation2 + $0x1c0] sm:$0xff]
    %v122 = vld [vmem:[#allocation2 + $0x1c8] sm:$0xff]
    %v123 = vld [vmem:[#allocation2 + $0x1d0] sm:$0xff]
    %v124 = vld [vmem:[#allocation2 + $0x1d8] sm:$0xff]
    %v125 = vld [vmem:[#allocation2 + $0x1e0] sm:$0xff]
    %v126 = vld [vmem:[#allocation2 + $0x1e8] sm:$0xff]
    %v127 = vld [vmem:[#allocation2 + $0x1f0] sm:$0xff]
    %v128 = vld [vmem:[#allocation2 + $0x1f8] sm:$0xff]
    %v129 = vld [vmem:[#allocation5] sm:$0xff]
    %v130 = vld [vmem:[#allocation5 + $0x8] sm:$0xff]
    %v131 = vld [vmem:[#allocation5 + $0x10] sm:$0xff]
    %v132 = vld [vmem:[#allocation5 + $0x18] sm:$0xff]
    %v133 = vld [vmem:[#allocation5 + $0x20] sm:$0xff]
    %v134 = vld [vmem:[#allocation5 + $0x28] sm:$0xff]
    %v135 = vld [vmem:[#allocation5 + $0x30] sm:$0xff]
    %v136 = vld [vmem:[#allocation5 + $0x38] sm:$0xff]
    %v137 = vld [vmem:[#allocation5 + $0x40] sm:$0xff]
    %v138 = vld [vmem:[#allocation5 + $0x48] sm:$0xff]
    %v139 = vld [vmem:[#allocation5 + $0x50] sm:$0xff]
    %v140 = vld [vmem:[#allocation5 + $0x58] sm:$0xff]
    %v141 = vld [vmem:[#allocation5 + $0x60] sm:$0xff]
    %v142 = vld [vmem:[#allocation5 + $0x68] sm:$0xff]
    %v143 = vld [vmem:[#allocation5 + $0x70] sm:$0xff]
    %v144 = vld [vmem:[#allocation5 + $0x78] sm:$0xff]
    %v145 = vld [vmem:[%s2] sm:$0x1]
    %v147 = vlaneseq
    %v148 = vshrl.u32 %v147, 7
    %v149 = vsub.s32 0, %v148
    %v150 = vrot.slane %v145, %v149
    %152 = vmatprep.subr.mxu0 0.0
    %153 = vmatpush1.msra.mxu0 %v129
    %154 = vmatprep.subr.mxu0 0.0
    %155 = vmatpush1.msra.mxu0 %v130
    %156 = vmatprep.subr.mxu0 0.0
    %157 = vmatpush1.msra.mxu0 %v131
    %158 = vmatprep.subr.mxu0 0.0
    %159 = vmatpush1.msra.mxu0 %v132
    %160 = vmatprep.subr.mxu0 0.0
    %161 = vmatpush1.msra.mxu0 %v133
    %162 = vmatprep.subr.mxu0 0.0
    %163 = vmatpush1.msra.mxu0 %v134
    %164 = vmatprep.subr.mxu0 0.0
    %165 = vmatpush1.msra.mxu0 %v135
    %166 = vmatprep.subr.mxu0 0.0
    %167 = vmatpush1.msra.mxu0 %v136
    %168 = vmatprep.subr.mxu0 0.0
    %169 = vmatpush1.msra.mxu0 %v137
    %170 = vmatprep.subr.mxu0 0.0
    %171 = vmatpush1.msra.mxu0 %v138
    %172 = vmatprep.subr.mxu0 0.0
    %173 = vmatpush1.msra.mxu0 %v139
    %174 = vmatprep.subr.mxu0 0.0
    %175 = vmatpush1.msra.mxu0 %v140
    %176 = vmatprep.subr.mxu0 0.0
    %177 = vmatpush1.msra.mxu0 %v141
    %178 = vmatprep.subr.mxu0 0.0
    %179 = vmatpush1.msra.mxu0 %v142
    %180 = vmatprep.subr.mxu0 0.0
    %181 = vmatpush1.msra.mxu0 %v143
    %182 = vmatprep.subr.mxu0 0.0
    %183 = vmatpush1.msra.mxu0 %v144
    %184 = vmatprep.subr.mxu0 0.0
    %185 = vmatpush1.msra.mxu0 0.0
    %186 = vmatprep.subr.mxu0 0.0
    %187 = vmatpush1.msra.mxu0 0.0
    %188 = vmatprep.subr.mxu0 0.0
    %189 = vmatpush1.msra.mxu0 0.0
    %190 = vmatprep.subr.mxu0 0.0
    %191 = vmatpush1.msra.mxu0 0.0
    %192 = vmatprep.subr.mxu0 0.0
    %193 = vmatpush1.msra.mxu0 0.0
    %194 = vmatprep.subr.mxu0 0.0
    %195 = vmatpush1.msra.mxu0 0.0
    %196 = vmatprep.subr.mxu0 0.0
    %197 = vmatpush1.msra.mxu0 0.0
    %198 = vmatprep.subr.mxu0 0.0
    %199 = vmatpush1.msra.mxu0 0.0
    %200 = vmatprep.subr.mxu0 0.0
    %201 = vmatpush1.msra.mxu0 0.0
    %202 = vmatprep.subr.mxu0 0.0
    %203 = vmatpush1.msra.mxu0 0.0
    %204 = vmatprep.subr.mxu0 0.0
    %205 = vmatpush1.msra.mxu0 0.0
    %206 = vmatprep.subr.mxu0 0.0
    %207 = vmatpush1.msra.mxu0 0.0
    %208 = vmatprep.subr.mxu0 0.0
    %209 = vmatpush1.msra.mxu0 0.0
    %210 = vmatprep.subr.mxu0 0.0
    %211 = vmatpush1.msra.mxu0 0.0
    %212 = vmatprep.subr.mxu0 0.0
    %213 = vmatpush1.msra.mxu0 0.0
    %214 = vmatprep.subr.mxu0 0.0
    %215 = vmatpush1.msra.mxu0 0.0
    %216 = vmatprep.mubr.f32.mxu0 0.0
    %217 = vmatmul.mubr.f32.gmra.mrb[0].mxu0 %v65
    %v218 = vpop.f32.mrb[0].mxu0
    %v219 = vadd.f32 %v150, %v218
    %v220 = vpop.f32.mrb[0].mxu0
    %221 = vmatprep.mubr.f32.mxu0 0.0
    %222 = vmatmul.mubr.f32.gmra.mrb[0].mxu0 %v66
    %v223 = vpop.f32.mrb[0].mxu0
    %v224 = vadd.f32 %v150, %v223
    %v225 = vpop.f32.mrb[0].mxu0
    %226 = vmatprep.mubr.f32.mxu0 0.0
    %227 = vmatmul.mubr.f32.gmra.mrb[0].mxu0 %v67
    %v228 = vpop.f32.mrb[0].mxu0
    %v229 = vadd.f32 %v150, %v228
    %v230 = vpop.f32.mrb[0].mxu0
    %231 = vmatprep.mubr.f32.mxu0 0.0
    %232 = vmatmul.mubr.f32.gmra.mrb[0].mxu0 %v68
    %v233 = vpop.f32.mrb[0].mxu0
    %v234 = vadd.f32 %v150, %v233
    %v235 = vpop.f32.mrb[0].mxu0
    %236 = vmatprep.mubr.f32.mxu0 0.0
    %237 = vmatmul.mubr.f32.gmra.mrb[0].mxu0 %v69
    %v238 = vpop.f32.mrb[0].mxu0
    %v239 = vadd.f32 %v150, %v238
    %v240 = vpop.f32.mrb[0].mxu0
    %241 = vmatprep.mubr.f32.mxu0 0.0
    %242 = vmatmul.mubr.f32.gmra.mrb[0].mxu0 %v70
    %v243 = vpop.f32.mrb[0].mxu0
    %v244 = vadd.f32 %v150, %v243
    %v245 = vpop.f32.mrb[0].mxu0
    %246 = vmatprep.mubr.f32.mxu0 0.0
    %247 = vmatmul.mubr.f32.gmra.mrb[0].mxu0 %v71
    %v248 = vpop.f32.mrb[0].mxu0
    %v249 = vadd.f32 %v150, %v248
    %v250 = vpop.f32.mrb[0].mxu0
    %251 = vmatprep.mubr.f32.mxu0 0.0
    %252 = vmatmul.mubr.f32.gmra.mrb[0].mxu0 %v72
    %v253 = vpop.f32.mrb[0].mxu0
    %v254 = vadd.f32 %v150, %v253
    %v255 = vpop.f32.mrb[0].mxu0
    %256 = vmatprep.mubr.f32.mxu0 0.0
    %257 = vmatmul.mubr.f32.gmra.mrb[0].mxu0 %v73
    %v258 = vpop.f32.mrb[0].mxu0
    %v259 = vadd.f32 %v150, %v258
    %v260 = vpop.f32.mrb[0].mxu0
    %261 = vmatprep.mubr.f32.mxu0 0.0
    %262 = vmatmul.mubr.f32.gmra.mrb[0].mxu0 %v74
    %v263 = vpop.f32.mrb[0].mxu0
    %v264 = vadd.f32 %v150, %v263
    %v265 = vpop.f32.mrb[0].mxu0
    %266 = vmatprep.mubr.f32.mxu0 0.0
    %267 = vmatmul.mubr.f32.gmra.mrb[0].mxu0 %v75
    %v268 = vpop.f32.mrb[0].mxu0
    %v269 = vadd.f32 %v150, %v268
    %v270 = vpop.f32.mrb[0].mxu0
    %271 = vmatprep.mubr.f32.mxu0 0.0
    %272 = vmatmul.mubr.f32.gmra.mrb[0].mxu0 %v76
    %v273 = vpop.f32.mrb[0].mxu0
    %v274 = vadd.f32 %v150, %v273
    %v275 = vpop.f32.mrb[0].mxu0
    %276 = vmatprep.mubr.f32.mxu0 0.0
    %277 = vmatmul.mubr.f32.gmra.mrb[0].mxu0 %v77
    %v278 = vpop.f32.mrb[0].mxu0
    %v279 = vadd.f32 %v150, %v278
    %v280 = vpop.f32.mrb[0].mxu0
    %281 = vmatprep.mubr.f32.mxu0 0.0
    %282 = vmatmul.mubr.f32.gmra.mrb[0].mxu0 %v78
    %v283 = vpop.f32.mrb[0].mxu0
    %v284 = vadd.f32 %v150, %v283
    %v285 = vpop.f32.mrb[0].mxu0
    %286 = vmatprep.mubr.f32.mxu0 0.0
    %287 = vmatmul.mubr.f32.gmra.mrb[0].mxu0 %v79
    %v288 = vpop.f32.mrb[0].mxu0
    %v289 = vadd.f32 %v150, %v288
    %v290 = vpop.f32.mrb[0].mxu0
    %291 = vmatprep.mubr.f32.mxu0 0.0
    %292 = vmatmul.mubr.f32.gmra.mrb[0].mxu0 %v80
    %v293 = vpop.f32.mrb[0].mxu0
    %v294 = vadd.f32 %v150, %v293
    %v295 = vpop.f32.mrb[0].mxu0
    %296 = vmatprep.mubr.f32.mxu0 0.0
    %297 = vmatmul.mubr.f32.gmra.mrb[0].mxu0 %v81
    %v298 = vpop.f32.mrb[0].mxu0
    %v299 = vadd.f32 %v150, %v298
    %v300 = vpop.f32.mrb[0].mxu0
    %301 = vmatprep.mubr.f32.mxu0 0.0
    %302 = vmatmul.mubr.f32.gmra.mrb[0].mxu0 %v82
    %v303 = vpop.f32.mrb[0].mxu0
    %v304 = vadd.f32 %v150, %v303
    %v305 = vpop.f32.mrb[0].mxu0
    %306 = vmatprep.mubr.f32.mxu0 0.0
    %307 = vmatmul.mubr.f32.gmra.mrb[0].mxu0 %v83
    %v308 = vpop.f32.mrb[0].mxu0
    %v309 = vadd.f32 %v150, %v308
    %v310 = vpop.f32.mrb[0].mxu0
    %311 = vmatprep.mubr.f32.mxu0 0.0
    %312 = vmatmul.mubr.f32.gmra.mrb[0].mxu0 %v84
    %v313 = vpop.f32.mrb[0].mxu0
    %v314 = vadd.f32 %v150, %v313
    %v315 = vpop.f32.mrb[0].mxu0
    %316 = vmatprep.mubr.f32.mxu0 0.0
    %317 = vmatmul.mubr.f32.gmra.mrb[0].mxu0 %v85
    %v318 = vpop.f32.mrb[0].mxu0
    %v319 = vadd.f32 %v150, %v318
    %v320 = vpop.f32.mrb[0].mxu0
    %321 = vmatprep.mubr.f32.mxu0 0.0
    %322 = vmatmul.mubr.f32.gmra.mrb[0].mxu0 %v86
    %v323 = vpop.f32.mrb[0].mxu0
    %v324 = vadd.f32 %v150, %v323
    %v325 = vpop.f32.mrb[0].mxu0
    %326 = vmatprep.mubr.f32.mxu0 0.0
    %327 = vmatmul.mubr.f32.gmra.mrb[0].mxu0 %v87
    %v328 = vpop.f32.mrb[0].mxu0
    %v329 = vadd.f32 %v150, %v328
    %v330 = vpop.f32.mrb[0].mxu0
    %331 = vmatprep.mubr.f32.mxu0 0.0
    %332 = vmatmul.mubr.f32.gmra.mrb[0].mxu0 %v88
    %v333 = vpop.f32.mrb[0].mxu0
    %v334 = vadd.f32 %v150, %v333
    %v335 = vpop.f32.mrb[0].mxu0
    %336 = vmatprep.mubr.f32.mxu0 0.0
    %337 = vmatmul.mubr.f32.gmra.mrb[0].mxu0 %v89
    %v338 = vpop.f32.mrb[0].mxu0
    %v339 = vadd.f32 %v150, %v338
    %v340 = vpop.f32.mrb[0].mxu0
    %341 = vmatprep.mubr.f32.mxu0 0.0
    %342 = vmatmul.mubr.f32.gmra.mrb[0].mxu0 %v90
    %v343 = vpop.f32.mrb[0].mxu0
    %v344 = vadd.f32 %v150, %v343
    %v345 = vpop.f32.mrb[0].mxu0
    %346 = vmatprep.mubr.f32.mxu0 0.0
    %347 = vmatmul.mubr.f32.gmra.mrb[0].mxu0 %v91
    %v348 = vpop.f32.mrb[0].mxu0
    %v349 = vadd.f32 %v150, %v348
    %v350 = vpop.f32.mrb[0].mxu0
    %351 = vmatprep.mubr.f32.mxu0 0.0
    %352 = vmatmul.mubr.f32.gmra.mrb[0].mxu0 %v92
    %v353 = vpop.f32.mrb[0].mxu0
    %v354 = vadd.f32 %v150, %v353
    %v355 = vpop.f32.mrb[0].mxu0
    %356 = vmatprep.mubr.f32.mxu0 0.0
    %357 = vmatmul.mubr.f32.gmra.mrb[0].mxu0 %v93
    %v358 = vpop.f32.mrb[0].mxu0
    %v359 = vadd.f32 %v150, %v358
    %v360 = vpop.f32.mrb[0].mxu0
    %361 = vmatprep.mubr.f32.mxu0 0.0
    %362 = vmatmul.mubr.f32.gmra.mrb[0].mxu0 %v94
    %v363 = vpop.f32.mrb[0].mxu0
    %v364 = vadd.f32 %v150, %v363
    %v365 = vpop.f32.mrb[0].mxu0
    %366 = vmatprep.mubr.f32.mxu0 0.0
    %367 = vmatmul.mubr.f32.gmra.mrb[0].mxu0 %v95
    %v368 = vpop.f32.mrb[0].mxu0
    %v369 = vadd.f32 %v150, %v368
    %v370 = vpop.f32.mrb[0].mxu0
    %371 = vmatprep.mubr.f32.mxu0 0.0
    %372 = vmatmul.mubr.f32.gmra.mrb[0].mxu0 %v96
    %v373 = vpop.f32.mrb[0].mxu0
    %v374 = vadd.f32 %v150, %v373
    %v375 = vpop.f32.mrb[0].mxu0
    %376 = vmatprep.mubr.f32.mxu0 0.0
    %377 = vmatmul.mubr.f32.gmra.mrb[0].mxu0 %v97
    %v378 = vpop.f32.mrb[0].mxu0
    %v379 = vadd.f32 %v150, %v378
    %v380 = vpop.f32.mrb[0].mxu0
    %381 = vmatprep.mubr.f32.mxu0 0.0
    %382 = vmatmul.mubr.f32.gmra.mrb[0].mxu0 %v98
    %v383 = vpop.f32.mrb[0].mxu0
    %v384 = vadd.f32 %v150, %v383
    %v385 = vpop.f32.mrb[0].mxu0
    %386 = vmatprep.mubr.f32.mxu0 0.0
    %387 = vmatmul.mubr.f32.gmra.mrb[0].mxu0 %v99
    %v388 = vpop.f32.mrb[0].mxu0
    %v389 = vadd.f32 %v150, %v388
    %v390 = vpop.f32.mrb[0].mxu0
    %391 = vmatprep.mubr.f32.mxu0 0.0
    %392 = vmatmul.mubr.f32.gmra.mrb[0].mxu0 %v100
    %v393 = vpop.f32.mrb[0].mxu0
    %v394 = vadd.f32 %v150, %v393
    %v395 = vpop.f32.mrb[0].mxu0
    %396 = vmatprep.mubr.f32.mxu0 0.0
    %397 = vmatmul.mubr.f32.gmra.mrb[0].mxu0 %v101
    %v398 = vpop.f32.mrb[0].mxu0
    %v399 = vadd.f32 %v150, %v398
    %v400 = vpop.f32.mrb[0].mxu0
    %401 = vmatprep.mubr.f32.mxu0 0.0
    %402 = vmatmul.mubr.f32.gmra.mrb[0].mxu0 %v102
    %v403 = vpop.f32.mrb[0].mxu0
    %v404 = vadd.f32 %v150, %v403
    %v405 = vpop.f32.mrb[0].mxu0
    %406 = vmatprep.mubr.f32.mxu0 0.0
    %407 = vmatmul.mubr.f32.gmra.mrb[0].mxu0 %v103
    %v408 = vpop.f32.mrb[0].mxu0
    %v409 = vadd.f32 %v150, %v408
    %v410 = vpop.f32.mrb[0].mxu0
    %411 = vmatprep.mubr.f32.mxu0 0.0
    %412 = vmatmul.mubr.f32.gmra.mrb[0].mxu0 %v104
    %v413 = vpop.f32.mrb[0].mxu0
    %v414 = vadd.f32 %v150, %v413
    %v415 = vpop.f32.mrb[0].mxu0
    %416 = vmatprep.mubr.f32.mxu0 0.0
    %417 = vmatmul.mubr.f32.gmra.mrb[0].mxu0 %v105
    %v418 = vpop.f32.mrb[0].mxu0
    %v419 = vadd.f32 %v150, %v418
    %v420 = vpop.f32.mrb[0].mxu0
    %421 = vmatprep.mubr.f32.mxu0 0.0
    %422 = vmatmul.mubr.f32.gmra.mrb[0].mxu0 %v106
    %v423 = vpop.f32.mrb[0].mxu0
    %v424 = vadd.f32 %v150, %v423
    %v425 = vpop.f32.mrb[0].mxu0
    %426 = vmatprep.mubr.f32.mxu0 0.0
    %427 = vmatmul.mubr.f32.gmra.mrb[0].mxu0 %v107
    %v428 = vpop.f32.mrb[0].mxu0
    %v429 = vadd.f32 %v150, %v428
    %v430 = vpop.f32.mrb[0].mxu0
    %431 = vmatprep.mubr.f32.mxu0 0.0
    %432 = vmatmul.mubr.f32.gmra.mrb[0].mxu0 %v108
    %v433 = vpop.f32.mrb[0].mxu0
    %v434 = vadd.f32 %v150, %v433
    %v435 = vpop.f32.mrb[0].mxu0
    %436 = vmatprep.mubr.f32.mxu0 0.0
    %437 = vmatmul.mubr.f32.gmra.mrb[0].mxu0 %v109
    %v438 = vpop.f32.mrb[0].mxu0
    %v439 = vadd.f32 %v150, %v438
    %v440 = vpop.f32.mrb[0].mxu0
    %441 = vmatprep.mubr.f32.mxu0 0.0
    %442 = vmatmul.mubr.f32.gmra.mrb[0].mxu0 %v110
    %v443 = vpop.f32.mrb[0].mxu0
    %v444 = vadd.f32 %v150, %v443
    %v445 = vpop.f32.mrb[0].mxu0
    %446 = vmatprep.mubr.f32.mxu0 0.0
    %447 = vmatmul.mubr.f32.gmra.mrb[0].mxu0 %v111
    %v448 = vpop.f32.mrb[0].mxu0
    %v449 = vadd.f32 %v150, %v448
    %v450 = vpop.f32.mrb[0].mxu0
    %451 = vmatprep.mubr.f32.mxu0 0.0
    %452 = vmatmul.mubr.f32.gmra.mrb[0].mxu0 %v112
    %v453 = vpop.f32.mrb[0].mxu0
    %v454 = vadd.f32 %v150, %v453
    %v455 = vpop.f32.mrb[0].mxu0
    %456 = vmatprep.mubr.f32.mxu0 0.0
    %457 = vmatmul.mubr.f32.gmra.mrb[0].mxu0 %v113
    %v458 = vpop.f32.mrb[0].mxu0
    %v459 = vadd.f32 %v150, %v458
    %v460 = vpop.f32.mrb[0].mxu0
    %461 = vmatprep.mubr.f32.mxu0 0.0
    %462 = vmatmul.mubr.f32.gmra.mrb[0].mxu0 %v114
    %v463 = vpop.f32.mrb[0].mxu0
    %v464 = vadd.f32 %v150, %v463
    %v465 = vpop.f32.mrb[0].mxu0
    %466 = vmatprep.mubr.f32.mxu0 0.0
    %467 = vmatmul.mubr.f32.gmra.mrb[0].mxu0 %v115
    %v468 = vpop.f32.mrb[0].mxu0
    %v469 = vadd.f32 %v150, %v468
    %v470 = vpop.f32.mrb[0].mxu0
    %471 = vmatprep.mubr.f32.mxu0 0.0
    %472 = vmatmul.mubr.f32.gmra.mrb[0].mxu0 %v116
    %v473 = vpop.f32.mrb[0].mxu0
    %v474 = vadd.f32 %v150, %v473
    %v475 = vpop.f32.mrb[0].mxu0
    %476 = vmatprep.mubr.f32.mxu0 0.0
    %477 = vmatmul.mubr.f32.gmra.mrb[0].mxu0 %v117
    %v478 = vpop.f32.mrb[0].mxu0
    %v479 = vadd.f32 %v150, %v478
    %v480 = vpop.f32.mrb[0].mxu0
    %481 = vmatprep.mubr.f32.mxu0 0.0
    %482 = vmatmul.mubr.f32.gmra.mrb[0].mxu0 %v118
    %v483 = vpop.f32.mrb[0].mxu0
    %v484 = vadd.f32 %v150, %v483
    %v485 = vpop.f32.mrb[0].mxu0
    %486 = vmatprep.mubr.f32.mxu0 0.0
    %487 = vmatmul.mubr.f32.gmra.mrb[0].mxu0 %v119
    %v488 = vpop.f32.mrb[0].mxu0
    %v489 = vadd.f32 %v150, %v488
    %v490 = vpop.f32.mrb[0].mxu0
    %491 = vmatprep.mubr.f32.mxu0 0.0
    %492 = vmatmul.mubr.f32.gmra.mrb[0].mxu0 %v120
    %v493 = vpop.f32.mrb[0].mxu0
    %v494 = vadd.f32 %v150, %v493
    %v495 = vpop.f32.mrb[0].mxu0
    %496 = vmatprep.mubr.f32.mxu0 0.0
    %497 = vmatmul.mubr.f32.gmra.mrb[0].mxu0 %v121
    %v498 = vpop.f32.mrb[0].mxu0
    %v499 = vadd.f32 %v150, %v498
    %v500 = vpop.f32.mrb[0].mxu0
    %501 = vmatprep.mubr.f32.mxu0 0.0
    %502 = vmatmul.mubr.f32.gmra.mrb[0].mxu0 %v122
    %v503 = vpop.f32.mrb[0].mxu0
    %v504 = vadd.f32 %v150, %v503
    %v505 = vpop.f32.mrb[0].mxu0
    %506 = vmatprep.mubr.f32.mxu0 0.0
    %507 = vmatmul.mubr.f32.gmra.mrb[0].mxu0 %v123
    %v508 = vpop.f32.mrb[0].mxu0
    %v509 = vadd.f32 %v150, %v508
    %v510 = vpop.f32.mrb[0].mxu0
    %511 = vmatprep.mubr.f32.mxu0 0.0
    %512 = vmatmul.mubr.f32.gmra.mrb[0].mxu0 %v124
    %v513 = vpop.f32.mrb[0].mxu0
    %v514 = vadd.f32 %v150, %v513
    %v515 = vpop.f32.mrb[0].mxu0
    %516 = vmatprep.mubr.f32.mxu0 0.0
    %517 = vmatmul.mubr.f32.gmra.mrb[0].mxu0 %v125
    %v518 = vpop.f32.mrb[0].mxu0
    %v519 = vadd.f32 %v150, %v518
    %v520 = vpop.f32.mrb[0].mxu0
    %521 = vmatprep.mubr.f32.mxu0 0.0
    %522 = vmatmul.mubr.f32.gmra.mrb[0].mxu0 %v126
    %v523 = vpop.f32.mrb[0].mxu0
    %v524 = vadd.f32 %v150, %v523
    %v525 = vpop.f32.mrb[0].mxu0
    %526 = vmatprep.mubr.f32.mxu0 0.0
    %527 = vmatmul.mubr.f32.gmra.mrb[0].mxu0 %v127
    %v528 = vpop.f32.mrb[0].mxu0
    %v529 = vadd.f32 %v150, %v528
    %v530 = vpop.f32.mrb[0].mxu0
    %531 = vmatprep.mubr.f32.mxu0 0.0
    %532 = vmatmul.mubr.f32.gmra.mrb[0].mxu0 %v128
    %v533 = vpop.f32.mrb[0].mxu0
    %v534 = vadd.f32 %v150, %v533
    %v535 = vpop.f32.mrb[0].mxu0
    %536 = vdwg.mxu0
    %v537 = vmax.f32 %v219, 0.0
    %v538 = vmax.f32 %v224, 0.0
    %v539 = vmax.f32 %v229, 0.0
    %v540 = vmax.f32 %v234, 0.0
    %v541 = vmax.f32 %v239, 0.0
    %v542 = vmax.f32 %v244, 0.0
    %v543 = vmax.f32 %v249, 0.0
    %v544 = vmax.f32 %v254, 0.0
    %v545 = vmax.f32 %v259, 0.0
    %v546 = vmax.f32 %v264, 0.0
    %v547 = vmax.f32 %v269, 0.0
    %v548 = vmax.f32 %v274, 0.0
    %v549 = vmax.f32 %v279, 0.0
    %v550 = vmax.f32 %v284, 0.0
    %v551 = vmax.f32 %v289, 0.0
    %v552 = vmax.f32 %v294, 0.0
    %v553 = vmax.f32 %v299, 0.0
    %v554 = vmax.f32 %v304, 0.0
    %v555 = vmax.f32 %v309, 0.0
    %v556 = vmax.f32 %v314, 0.0
    %v557 = vmax.f32 %v319, 0.0
    %v558 = vmax.f32 %v324, 0.0
    %v559 = vmax.f32 %v329, 0.0
    %v560 = vmax.f32 %v334, 0.0
    %v561 = vmax.f32 %v339, 0.0
    %v562 = vmax.f32 %v344, 0.0
    %v563 = vmax.f32 %v349, 0.0
    %v564 = vmax.f32 %v354, 0.0
    %v565 = vmax.f32 %v359, 0.0
    %v566 = vmax.f32 %v364, 0.0
    %v567 = vmax.f32 %v369, 0.0
    %v568 = vmax.f32 %v374, 0.0
    %v569 = vmax.f32 %v379, 0.0
    %v570 = vmax.f32 %v384, 0.0
    %v571 = vmax.f32 %v389, 0.0
    %v572 = vmax.f32 %v394, 0.0
    %v573 = vmax.f32 %v399, 0.0
    %v574 = vmax.f32 %v404, 0.0
    %v575 = vmax.f32 %v409, 0.0
    %v576 = vmax.f32 %v414, 0.0
    %v577 = vmax.f32 %v419, 0.0
    %v578 = vmax.f32 %v424, 0.0
    %v579 = vmax.f32 %v429, 0.0
    %v580 = vmax.f32 %v434, 0.0
    %v581 = vmax.f32 %v439, 0.0
    %v582 = vmax.f32 %v444, 0.0
    %v583 = vmax.f32 %v449, 0.0
    %v584 = vmax.f32 %v454, 0.0
    %v585 = vmax.f32 %v459, 0.0
    %v586 = vmax.f32 %v464, 0.0
    %v587 = vmax.f32 %v469, 0.0
    %v588 = vmax.f32 %v474, 0.0
    %v589 = vmax.f32 %v479, 0.0
    %v590 = vmax.f32 %v484, 0.0
    %v591 = vmax.f32 %v489, 0.0
    %v592 = vmax.f32 %v494, 0.0
    %v593 = vmax.f32 %v499, 0.0
    %v594 = vmax.f32 %v504, 0.0
    %v595 = vmax.f32 %v509, 0.0
    %v596 = vmax.f32 %v514, 0.0
    %v597 = vmax.f32 %v519, 0.0
    %v598 = vmax.f32 %v524, 0.0
    %v599 = vmax.f32 %v529, 0.0
    %v600 = vmax.f32 %v534, 0.0
    %v601 = vld [vmem:[%s3] sm:$0xff]
    %v603 = vcombine.high %v601, %v601
    %v605 = vunpack.c.l.s4 1983009808
    %v606 = vunpack.c.0.s8 %v605
    %v607 = vlaneseq
    %v608 = vshrl.u32 %v607, 7
    %v609 = vsub.s32 %v606, %v608
    %v610 = vrot.slane %v601, %v609
    %v612 = vunpack.c.l.s4 1983009808
    %v613 = vunpack.c.0.s8 %v612
    %v614 = vlaneseq
    %v615 = vshrl.u32 %v614, 7
    %v616 = vsub.s32 %v613, %v615
    %v617 = vrot.slane %v603, %v616
    %v618 = vcombine.high %v610, %v610
    %v619 = vcombine.high %v617, %v617
    %624 = vmatprep.subr.mxu0 0.0
    %625 = vmatpush1.msra.mxu0 %v537
    %626 = vmatprep.subr.mxu0 0.0
    %627 = vmatpush1.msra.mxu0 %v538
    %628 = vmatprep.subr.mxu0 0.0
    %629 = vmatpush1.msra.mxu0 %v539
    %630 = vmatprep.subr.mxu0 0.0
    %631 = vmatpush1.msra.mxu0 %v540
    %632 = vmatprep.subr.mxu0 0.0
    %633 = vmatpush1.msra.mxu0 %v541
    %634 = vmatprep.subr.mxu0 0.0
    %635 = vmatpush1.msra.mxu0 %v542
    %636 = vmatprep.subr.mxu0 0.0
    %637 = vmatpush1.msra.mxu0 %v543
    %638 = vmatprep.subr.mxu0 0.0
    %639 = vmatpush1.msra.mxu0 %v544
    %640 = vmatprep.subr.mxu0 0.0
    %641 = vmatpush1.msra.mxu0 %v545
    %642 = vmatprep.subr.mxu0 0.0
    %643 = vmatpush1.msra.mxu0 %v546
    %644 = vmatprep.subr.mxu0 0.0
    %645 = vmatpush1.msra.mxu0 %v547
    %646 = vmatprep.subr.mxu0 0.0
    %647 = vmatpush1.msra.mxu0 %v548
    %648 = vmatprep.subr.mxu0 0.0
    %649 = vmatpush1.msra.mxu0 %v549
    %650 = vmatprep.subr.mxu0 0.0
    %651 = vmatpush1.msra.mxu0 %v550
    %652 = vmatprep.subr.mxu0 0.0
    %653 = vmatpush1.msra.mxu0 %v551
    %654 = vmatprep.subr.mxu0 0.0
    %655 = vmatpush1.msra.mxu0 %v552
    %656 = vmatprep.subr.mxu0 0.0
    %657 = vmatpush1.msra.mxu0 %v553
    %658 = vmatprep.subr.mxu0 0.0
    %659 = vmatpush1.msra.mxu0 %v554
    %660 = vmatprep.subr.mxu0 0.0
    %661 = vmatpush1.msra.mxu0 %v555
    %662 = vmatprep.subr.mxu0 0.0
    %663 = vmatpush1.msra.mxu0 %v556
    %664 = vmatprep.subr.mxu0 0.0
    %665 = vmatpush1.msra.mxu0 %v557
    %666 = vmatprep.subr.mxu0 0.0
    %667 = vmatpush1.msra.mxu0 %v558
    %668 = vmatprep.subr.mxu0 0.0
    %669 = vmatpush1.msra.mxu0 %v559
    %670 = vmatprep.subr.mxu0 0.0
    %671 = vmatpush1.msra.mxu0 %v560
    %672 = vmatprep.subr.mxu0 0.0
    %673 = vmatpush1.msra.mxu0 %v561
    %674 = vmatprep.subr.mxu0 0.0
    %675 = vmatpush1.msra.mxu0 %v562
    %676 = vmatprep.subr.mxu0 0.0
    %677 = vmatpush1.msra.mxu0 %v563
    %678 = vmatprep.subr.mxu0 0.0
    %679 = vmatpush1.msra.mxu0 %v564
    %680 = vmatprep.subr.mxu0 0.0
    %681 = vmatpush1.msra.mxu0 %v565
    %682 = vmatprep.subr.mxu0 0.0
    %683 = vmatpush1.msra.mxu0 %v566
    %684 = vmatprep.subr.mxu0 0.0
    %685 = vmatpush1.msra.mxu0 %v567
    %686 = vmatprep.subr.mxu0 0.0
    %687 = vmatpush1.msra.mxu0 %v568
    %688 = vmatprep.mubr.f32.mxu0 %v618
    %689 = vmatmul.mubr.f32.gmra.mrb[0].mxu0 %v610
    %v690 = vpop.f32.mrb[0].mxu0
    %v691 = vadd.f32 0.0, %v690
    %v692 = vpop.f32.mrb[0].mxu0
    %693 = vdwg.mxu0
    %694 = vmatprep.subr.mxu0 0.0
    %695 = vmatpush1.msra.mxu0 %v569
    %696 = vmatprep.subr.mxu0 0.0
    %697 = vmatpush1.msra.mxu0 %v570
    %698 = vmatprep.subr.mxu0 0.0
    %699 = vmatpush1.msra.mxu0 %v571
    %700 = vmatprep.subr.mxu0 0.0
    %701 = vmatpush1.msra.mxu0 %v572
    %702 = vmatprep.subr.mxu0 0.0
    %703 = vmatpush1.msra.mxu0 %v573
    %704 = vmatprep.subr.mxu0 0.0
    %705 = vmatpush1.msra.mxu0 %v574
    %706 = vmatprep.subr.mxu0 0.0
    %707 = vmatpush1.msra.mxu0 %v575
    %708 = vmatprep.subr.mxu0 0.0
    %709 = vmatpush1.msra.mxu0 %v576
    %710 = vmatprep.subr.mxu0 0.0
    %711 = vmatpush1.msra.mxu0 %v577
    %712 = vmatprep.subr.mxu0 0.0
    %713 = vmatpush1.msra.mxu0 %v578
    %714 = vmatprep.subr.mxu0 0.0
    %715 = vmatpush1.msra.mxu0 %v579
    %716 = vmatprep.subr.mxu0 0.0
    %717 = vmatpush1.msra.mxu0 %v580
    %718 = vmatprep.subr.mxu0 0.0
    %719 = vmatpush1.msra.mxu0 %v581
    %720 = vmatprep.subr.mxu0 0.0
    %721 = vmatpush1.msra.mxu0 %v582
    %722 = vmatprep.subr.mxu0 0.0
    %723 = vmatpush1.msra.mxu0 %v583
    %724 = vmatprep.subr.mxu0 0.0
    %725 = vmatpush1.msra.mxu0 %v584
    %726 = vmatprep.subr.mxu0 0.0
    %727 = vmatpush1.msra.mxu0 %v585
    %728 = vmatprep.subr.mxu0 0.0
    %729 = vmatpush1.msra.mxu0 %v586
    %730 = vmatprep.subr.mxu0 0.0
    %731 = vmatpush1.msra.mxu0 %v587
    %732 = vmatprep.subr.mxu0 0.0
    %733 = vmatpush1.msra.mxu0 %v588
    %734 = vmatprep.subr.mxu0 0.0
    %735 = vmatpush1.msra.mxu0 %v589
    %736 = vmatprep.subr.mxu0 0.0
    %737 = vmatpush1.msra.mxu0 %v590
    %738 = vmatprep.subr.mxu0 0.0
    %739 = vmatpush1.msra.mxu0 %v591
    %740 = vmatprep.subr.mxu0 0.0
    %741 = vmatpush1.msra.mxu0 %v592
    %742 = vmatprep.subr.mxu0 0.0
    %743 = vmatpush1.msra.mxu0 %v593
    %744 = vmatprep.subr.mxu0 0.0
    %745 = vmatpush1.msra.mxu0 %v594
    %746 = vmatprep.subr.mxu0 0.0
    %747 = vmatpush1.msra.mxu0 %v595
    %748 = vmatprep.subr.mxu0 0.0
    %749 = vmatpush1.msra.mxu0 %v596
    %750 = vmatprep.subr.mxu0 0.0
    %751 = vmatpush1.msra.mxu0 %v597
    %752 = vmatprep.subr.mxu0 0.0
    %753 = vmatpush1.msra.mxu0 %v598
    %754 = vmatprep.subr.mxu0 0.0
    %755 = vmatpush1.msra.mxu0 %v599
    %756 = vmatprep.subr.mxu0 0.0
    %757 = vmatpush1.msra.mxu0 %v600
    %758 = vmatprep.mubr.f32.mxu0 %v619
    %759 = vmatmul.mubr.f32.gmra.mrb[0].mxu0 %v617
    %v760 = vpop.f32.mrb[0].mxu0
    %v761 = vadd.f32 %v691, %v760
    %v762 = vpop.f32.mrb[0].mxu0
    %763 = vdwg.mxu0
    %v764 = vld [vmem:[#allocation7] sm:$0xff]
    %v765 = vld [vmem:[#allocation7 + $0x8] sm:$0xff]
    %v766 = vld [vmem:[#allocation7 + $0x10] sm:$0xff]
    %v767 = vld [vmem:[#allocation7 + $0x18] sm:$0xff]
    %v768 = vld [vmem:[#allocation7 + $0x20] sm:$0xff]
    %v769 = vld [vmem:[#allocation7 + $0x28] sm:$0xff]
    %v770 = vld [vmem:[#allocation7 + $0x30] sm:$0xff]
    %v771 = vld [vmem:[#allocation7 + $0x38] sm:$0xff]
    %v772 = vld [vmem:[#allocation7 + $0x40] sm:$0xff]
    %v773 = vld [vmem:[#allocation7 + $0x48] sm:$0xff]
    %v774 = vld [vmem:[#allocation7 + $0x50] sm:$0xff]
    %v775 = vld [vmem:[#allocation7 + $0x58] sm:$0xff]
    %v776 = vld [vmem:[#allocation7 + $0x60] sm:$0xff]
    %v777 = vld [vmem:[#allocation7 + $0x68] sm:$0xff]
    %v778 = vld [vmem:[#allocation7 + $0x70] sm:$0xff]
    %v779 = vld [vmem:[#allocation7 + $0x78] sm:$0xff]
    %v780 = vld [vmem:[%s5] sm:$0x1]
    %v782 = vlaneseq
    %v783 = vshrl.u32 %v782, 7
    %v784 = vsub.s32 0, %v783
    %v785 = vrot.slane %v780, %v784
    %787 = vmatprep.subr.mxu0 0.0
    %788 = vmatpush1.msra.mxu0 %v764
    %789 = vmatprep.subr.mxu0 0.0
    %790 = vmatpush1.msra.mxu0 %v765
    %791 = vmatprep.subr.mxu0 0.0
    %792 = vmatpush1.msra.mxu0 %v766
    %793 = vmatprep.subr.mxu0 0.0
    %794 = vmatpush1.msra.mxu0 %v767
    %795 = vmatprep.subr.mxu0 0.0
    %796 = vmatpush1.msra.mxu0 %v768
    %797 = vmatprep.subr.mxu0 0.0
    %798 = vmatpush1.msra.mxu0 %v769
    %799 = vmatprep.subr.mxu0 0.0
    %800 = vmatpush1.msra.mxu0 %v770
    %801 = vmatprep.subr.mxu0 0.0
    %802 = vmatpush1.msra.mxu0 %v771
    %803 = vmatprep.subr.mxu0 0.0
    %804 = vmatpush1.msra.mxu0 %v772
    %805 = vmatprep.subr.mxu0 0.0
    %806 = vmatpush1.msra.mxu0 %v773
    %807 = vmatprep.subr.mxu0 0.0
    %808 = vmatpush1.msra.mxu0 %v774
    %809 = vmatprep.subr.mxu0 0.0
    %810 = vmatpush1.msra.mxu0 %v775
    %811 = vmatprep.subr.mxu0 0.0
    %812 = vmatpush1.msra.mxu0 %v776
    %813 = vmatprep.subr.mxu0 0.0
    %814 = vmatpush1.msra.mxu0 %v777
    %815 = vmatprep.subr.mxu0 0.0
    %816 = vmatpush1.msra.mxu0 %v778
    %817 = vmatprep.subr.mxu0 0.0
    %818 = vmatpush1.msra.mxu0 %v779
    %819 = vmatprep.subr.mxu0 0.0
    %820 = vmatpush1.msra.mxu0 0.0
    %821 = vmatprep.subr.mxu0 0.0
    %822 = vmatpush1.msra.mxu0 0.0
    %823 = vmatprep.subr.mxu0 0.0
    %824 = vmatpush1.msra.mxu0 0.0
    %825 = vmatprep.subr.mxu0 0.0
    %826 = vmatpush1.msra.mxu0 0.0
    %827 = vmatprep.subr.mxu0 0.0
    %828 = vmatpush1.msra.mxu0 0.0
    %829 = vmatprep.subr.mxu0 0.0
    %830 = vmatpush1.msra.mxu0 0.0
    %831 = vmatprep.subr.mxu0 0.0
    %832 = vmatpush1.msra.mxu0 0.0
    %833 = vmatprep.subr.mxu0 0.0
    %834 = vmatpush1.msra.mxu0 0.0
    %835 = vmatprep.subr.mxu0 0.0
    %836 = vmatpush1.msra.mxu0 0.0
    %837 = vmatprep.subr.mxu0 0.0
    %838 = vmatpush1.msra.mxu0 0.0
    %839 = vmatprep.subr.mxu0 0.0
    %840 = vmatpush1.msra.mxu0 0.0
    %841 = vmatprep.subr.mxu0 0.0
    %842 = vmatpush1.msra.mxu0 0.0
    %843 = vmatprep.subr.mxu0 0.0
    %844 = vmatpush1.msra.mxu0 0.0
    %845 = vmatprep.subr.mxu0 0.0
    %846 = vmatpush1.msra.mxu0 0.0
    %847 = vmatprep.subr.mxu0 0.0
    %848 = vmatpush1.msra.mxu0 0.0
    %849 = vmatprep.subr.mxu0 0.0
    %850 = vmatpush1.msra.mxu0 0.0
    %851 = vmatprep.mubr.f32.mxu0 0.0
    %852 = vmatmul.mubr.f32.gmra.mrb[0].mxu0 %v761
    %v853 = vpop.f32.mrb[0].mxu0
    %v854 = vadd.f32 %v785, %v853
    %v855 = vpop.f32.mrb[0].mxu0
    %856 = vdwg.mxu0
    %857 = vst [vmem:[#allocation8] sm:$0x3] %v854
    // Predicated region
    $region38: #{tpu_custom_call.1} parent=1 // pred_check
      _
    $region39: #{tpu_custom_call.1} parent=1 // pred_check_branch
      %859 = sbr.rel (0) target = $region41
    $region40: #{tpu_custom_call.1} parent=1 // pred_region
      %s861 = ssub.s32 32, 32
      %862 = vsyncadd [#allocation4], %s861
      %s864 = sshll.u32 [#allocation8], 4
      %s865 = int_to_ptr.vmem [resolvable:$true] %s864
      %867 = dma.vmem_to_hbm [thread:$0]  %s865, 32, %s6, [#allocation4]
    $region41: #{tpu_custom_call.1} parent=1 // pred_fallthru
      _
    // Predicated region
    $region42: #{tpu_custom_call.1} parent=1 // pred_check
      _
    $region43: #{tpu_custom_call.1} parent=1 // pred_check_branch
      %869 = sbr.rel (0) target = $region45
    $region44: #{tpu_custom_call.1} parent=1 // pred_region
      %870 = dma.done [#allocation4], 32
    $region45: #{tpu_custom_call.1} parent=1 // pred_fallthru
      _
    %871 = vsyncpa [#allocation3], 1
    %872 = vsyncpa [#allocation6], 1
    %873 = vsyncpa [#allocation4], 1

</llo_original>
